<compile_context>
chip_gen: v7x
topology: tpu7x:2x2x1
jax: 0.10.0
libtpu: 0.0.40
codegen_flags: <defaults>
</compile_context>

<pallas_src>
import math

import jax
import jax.numpy as jnp
from jax import lax
from jax.experimental import pallas as pl
from jax.experimental.pallas import tpu as pltpu


_LANE = 128
_CHUNK = 2048                      # in-kernel lane chunk (bounds vreg pressure)
_TR_TARGET = 256 * 1024            # target lane-tile width per grid step
_VMEM_BUDGET = 36 * 1024 * 1024    # double-buffered in+out window budget
_VMEM_HEADROOM = 8 * 1024 * 1024   # slack for Mosaic-internal scratch


def _pad8(n):
    return ((n + 7) // 8) * 8


def _omega_kernel(x_ref, o_ref):
    # x_ref: [C, TR] in VMEM, o_ref: [C+1, TR] in VMEM (rows on the lane axis).
    c, tr = x_ref.shape
    chunk = min(_CHUNK, tr)
    n_chunks = tr // chunk
    rem = tr - n_chunks * chunk

    def process(off, width):
        sl = pl.ds(off, width)
        x = x_ref[:, sl]                     # (C, width) in the input dtype
        # Copy path: no cast round-trip, slice store (no concatenate).
        o_ref[:c, sl] = x
        # Omega accumulates in f32 regardless of input dtype.  C is tiny, so
        # the sublane reduce is cheap (explicit row adds would also work).
        s = jnp.sum(x.astype(jnp.float32), axis=0, keepdims=True)
        o_ref[c:c + 1, sl] = (1.0 - s).astype(o_ref.dtype)

    if n_chunks == 1:
        process(0, chunk)
    else:
        def body(i, carry):
            process(pl.multiple_of(i * chunk, _LANE), chunk)
            return carry
        lax.fori_loop(0, n_chunks, body, 0, unroll=2)
    if rem:  # static tail; never taken for wrapper-produced tile widths
        process(n_chunks * chunk, rem)


def omega_layer_channels_first(x_cf):
    """Transpose-free fast path: x_cf is [num_class, R] -> [num_class + 1, R]."""
    c, r = x_cf.shape
    itemsize = jnp.dtype(x_cf.dtype).itemsize
    # Double-buffered in+out VMEM bytes per lane column (sublanes pad to 8).
    per_lane = 2 * (_pad8(c) + _pad8(c + 1)) * itemsize

    if r >= _CHUNK:
        tr_cap = (_VMEM_BUDGET // per_lane) // _CHUNK * _CHUNK
        if tr_cap < _CHUNK:
            # Class dim too large for a sane tile; not a DS-layer shape.
            omega = 1.0 - jnp.sum(x_cf.astype(jnp.float32), axis=0, keepdims=True)
            return jnp.concatenate([x_cf, omega.astype(x_cf.dtype)], axis=0)
        tr = min(_TR_TARGET, tr_cap, (r // _CHUNK) * _CHUNK)
        # Keep >= 2 grid steps when there is enough work so both TensorCores
        # on v7x can take grid steps ("parallel" semantics).
        if r >= 2 * _CHUNK and pl.cdiv(r, tr) == 1:
            tr = max(_CHUNK, ((r // _CHUNK + 1) // 2) * _CHUNK)
    else:
        tr = r  # narrow full-dim block; only hit for tiny forced inputs

    grid = (pl.cdiv(r, tr),)
    vmem_limit = int(min(max(per_lane * tr + _VMEM_HEADROOM, 16 * 1024 * 1024),
                         48 * 1024 * 1024))
    cost = pl.CostEstimate(
        flops=r * c,
        transcendentals=0,
        bytes_accessed=(r * c + r * (c + 1)) * itemsize,
    )

    return pl.pallas_call(
        _omega_kernel,
        out_shape=jax.ShapeDtypeStruct((c + 1, r), x_cf.dtype),
        grid=grid,
        in_specs=[pl.BlockSpec((c, tr), lambda i: (0, i))],
        out_specs=pl.BlockSpec((c + 1, tr), lambda i: (0, i)),
        compiler_params=pltpu.CompilerParams(
            dimension_semantics=("parallel",),
            vmem_limit_bytes=vmem_limit,
        ),
        cost_estimate=cost,
    )(x_cf)


def omega_layer(inputs, *, min_rows_for_pallas=2048):
    """Pallas equivalent of Omega_layer.forward: [..., C] -> [..., C + 1].

    NOTE: matching the PyTorch channels-last interface forces two relayout
    passes ([R, C] <-> [C, R]) around the kernel, which dominate end-to-end
    HBM traffic for this mem-bound op.  Callers that can keep a channels-first
    activation layout should call `omega_layer_channels_first` directly and
    skip both transposes.
    """
    orig_shape = inputs.shape
    c = orig_shape[-1]
    r = math.prod(orig_shape[:-1]) if len(orig_shape) > 1 else 1

    if r < min_rows_for_pallas:
        # Tiny workload: let XLA fuse the reduce + concat into surrounding ops.
        omega = 1.0 - jnp.sum(inputs.astype(jnp.float32), axis=-1, keepdims=True)
        return jnp.concatenate([inputs, omega.astype(inputs.dtype)], axis=-1)

    x_cf = inputs.reshape(r, c).T                      # relayout #1 (see note)
    out_cf = omega_layer_channels_first(x_cf)
    return out_cf.T.reshape(*orig_shape[:-1], c + 1)   # relayout #2


def _reference(x):
    omega = 1.0 - jnp.sum(x.astype(jnp.float32), axis=-1, keepdims=True)
    return jnp.concatenate([x, omega.astype(x.dtype)], axis=-1)


if __name__ == "__main__":
    # Omega_layer has no learnable parameters; n_prototypes / num_class only
    # describe the expected input layout.
    n_prototypes = 8
    num_class = 4
    batch = 2

    key = jax.random.PRNGKey(0)
    k0, k1 = jax.random.split(key)

    # 1) Small module-shaped input [batch, n_prototypes, num_class]; force the
    #    Pallas path (single narrow full-dim lane tile).
    x_small = jax.random.uniform(
        k0, (batch, n_prototypes, num_class), dtype=jnp.float32) * 0.2
    y_small = jax.block_until_ready(omega_layer(x_small, min_rows_for_pallas=0))
    assert y_small.shape == (batch, n_prototypes, num_class + 1), y_small.shape
    assert jnp.allclose(y_small, _reference(x_small), atol=1e-6), "small mismatch"

    # 2) Larger shape exercising >= 2 grid steps and a partial last lane tile
    #    (R = 40 * 64 = 2560 -> tiles of 2048 + partial 512).
    x_big = jax.random.uniform(k1, (40, 64, num_class), dtype=jnp.float32) * 0.2
    y_big = jax.block_until_ready(omega_layer(x_big, min_rows_for_pallas=0))
    assert y_big.shape == (40, 64, num_class + 1), y_big.shape
    assert jnp.allclose(y_big, _reference(x_big), atol=1e-6), "big mismatch"

    # 3) Channels-first fast path (no wrapper transposes).
    x_cf = x_big.reshape(-1, num_class).T
    y_cf = jax.block_until_ready(omega_layer_channels_first(x_cf))
    assert jnp.allclose(y_cf.T.reshape(40, 64, num_class + 1),
                        _reference(x_big), atol=1e-6), "channels-first mismatch"

    # 4) Default (fallback) path for the tiny shape should also match.
    y_fb = jax.block_until_ready(omega_layer(x_small))
    assert jnp.allclose(y_fb, _reference(x_small), atol=1e-6), "fallback mismatch"

    print("KERNEL_OK")
</pallas_src>

<mosaic_0001>
module attributes {stable_mosaic.version = 11 : i64} {
  func.func @_omega_kernel(%arg0: i32, %arg1: memref<4x16xf32, #tpu.memory_space<vmem>>, %arg2: memref<5x16xf32, #tpu.memory_space<vmem>>) attributes {dimension_semantics = [#tpu.dimension_semantics<parallel>], iteration_bounds = array<i64: 1>, scalar_prefetch = 0 : i64, scratch_operands = 0 : i64, tpu.core_type = #tpu.core_type<tc>, window_params = [{transform_indices = @transform_0, window_bounds = array<i64: 4, 16>}, {transform_indices = @transform_1, window_bounds = array<i64: 5, 16>}]} {
    %c0 = arith.constant 0 : index
    %c0_0 = arith.constant 0 : index
    %0 = vector.load %arg1[%c0, %c0_0] : memref<4x16xf32, #tpu.memory_space<vmem>>, vector<4x16xf32>
    %c0_1 = arith.constant 0 : index
    %c0_2 = arith.constant 0 : index
    %1 = vector.load %arg2[%c0_1, %c0_2] : memref<5x16xf32, #tpu.memory_space<vmem>>, vector<4x16xf32>
    tpu.vector_store %arg2[%c0_1, %c0_2], %0 {strides = array<i32>} : memref<5x16xf32, #tpu.memory_space<vmem>>, vector<4x16xf32>,
    %cst = arith.constant dense<0.000000e+00> : vector<16xf32>
    %2 = vector.multi_reduction <add>, %0, %cst [0] : vector<4x16xf32> to vector<16xf32>
    %3 = vector.shape_cast %2 : vector<16xf32> to vector<1x16xf32>
    %cst_3 = arith.constant 1.000000e+00 : f32
    %4 = vector.broadcast %cst_3 : f32 to vector<1x16xf32>
    %5 = arith.subf %4, %3 : vector<1x16xf32>
    %c4 = arith.constant 4 : index
    %c0_4 = arith.constant 0 : index
    %6 = vector.load %arg2[%c4, %c0_4] : memref<5x16xf32, #tpu.memory_space<vmem>>, vector<1x16xf32>
    tpu.vector_store %arg2[%c4, %c0_4], %5 {strides = array<i32>} : memref<5x16xf32, #tpu.memory_space<vmem>>, vector<1x16xf32>,
    return
  }
  func.func @transform_0(%arg0: i32) -> (i32, i32) {
    %c0_i32 = arith.constant 0 : i32
    %c0_i32_0 = arith.constant 0 : i32
    return %c0_i32, %arg0 : i32, i32
  }
  func.func @transform_1(%arg0: i32) -> (i32, i32) {
    %c0_i32 = arith.constant 0 : i32
    %c0_i32_0 = arith.constant 0 : i32
    return %c0_i32, %arg0 : i32, i32
  }
}

</mosaic_0001>

<llo_original>
// kernel: tpu_custom_call.1
$region0: #{tpu_custom_call.1}
  #allocation0 [shape = 'u32[]', space=smem, size = 0x4, offset = 0x4, fixed_abs, tag = 'smem constant byte address 0x4 - core index']
  #allocation1 [shape = 'u32[144,128]{1,0:T(1,128)}', space=vmem, size = 0x12000, scoped, tag = 'internal scratch']
  %s0 = inlined_call_operand.hbm [shape: f32[4,16], index: 0, kind: input, shape index: {}]
  %s1 = inlined_call_operand.hbm [shape: f32[5,16], index: 1, kind: output, shape index: {}]
  %s2 = sld [smem:[#allocation0]]
  $region18: #{tpu_custom_call.1} parent=0
    _
  %s4 = ssub.s32 1, %s2
  %s5 = scalar_select 0, %s4, %s2
  $region1: #{tpu_custom_call.1} parent=0
    #allocation2 [shape = 'u8[2048]{0}', space=vmem, size = 0x800, scoped, tag = 'input window, operand 0, single buffered']
    #allocation3 [shape = 's32[1]{0}', space=sflag, size = 0x4, scoped, tag = 'scoped memory for tpu_custom_call.1']
    #allocation4 [shape = 's32[1]{0}', space=sflag, size = 0x4, scoped, tag = 'scoped memory for tpu_custom_call.1']
    #allocation5 [shape = 'u8[4096]{0}', space=vmem, size = 0x1000, scoped, tag = 'output window, operand 0, single buffered']
    %6 = vsyncpa [#allocation3], 0
    %7 = vsyncpa [#allocation4], 0
    // Predicated region
    $region2: #{tpu_custom_call.1} parent=1 // pred_check
      _
    $region3: #{tpu_custom_call.1} parent=1 // pred_check_branch
      %9 = sbr.rel (0) target = $region5
    $region4: #{tpu_custom_call.1} parent=1 // pred_region
      %s11 = ssub.s32 64, 64
      %12 = vsyncadd [#allocation3], %s11
      %s14 = sshll.u32 [#allocation2], 4
      %s15 = int_to_ptr.vmem [resolvable:$true] %s14
      %17 = dma.hbm_to_vmem [thread:$0]  %s0, 64, %s15, [#allocation3]
    $region5: #{tpu_custom_call.1} parent=1 // pred_fallthru
      _
    // Predicated region
    $region6: #{tpu_custom_call.1} parent=1 // pred_check
      _
    $region7: #{tpu_custom_call.1} parent=1 // pred_check_branch
      %19 = sbr.rel (0) target = $region9
    $region8: #{tpu_custom_call.1} parent=1 // pred_region
      %20 = dma.done [#allocation3], 64
    $region9: #{tpu_custom_call.1} parent=1 // pred_fallthru
      _
    %v21 = vld [vmem:[#allocation2] sm:$0xf]
    %vm22 = vcmask 125952
    %23 = vst.msk [vmem:[#allocation5] sm:$0xf] %vm22, %v21
    %v24 = vsel %vm22, %v21, 0.0
    %v25 = vrot.slane %v24, 4
    %v26 = vadd.f32 %v24, %v25
    %v27 = vrot.slane %v26, 2
    %v28 = vadd.f32 %v26, %v27
    %v29 = vrot.slane %v28, 1
    %v30 = vadd.f32 %v28, %v29
    %v31 = vsub.f32 1.0, %v30
    %vm32 = vcmask 122880
    %33 = vst.msk [vmem:[#allocation5 + $0x4] sm:$0x1] %vm32, %v31
    // Predicated region
    $region10: #{tpu_custom_call.1} parent=1 // pred_check
      _
    $region11: #{tpu_custom_call.1} parent=1 // pred_check_branch
      %35 = sbr.rel (0) target = $region13
    $region12: #{tpu_custom_call.1} parent=1 // pred_region
      %s37 = ssub.s32 128, 128
      %38 = vsyncadd [#allocation4], %s37
      %s40 = sshll.u32 [#allocation5], 4
      %s41 = int_to_ptr.vmem [resolvable:$true] %s40
      %43 = dma.vmem_to_hbm [thread:$0]  %s41, 128, %s1, [#allocation4]
    $region13: #{tpu_custom_call.1} parent=1 // pred_fallthru
      _
    // Predicated region
    $region14: #{tpu_custom_call.1} parent=1 // pred_check
      _
    $region15: #{tpu_custom_call.1} parent=1 // pred_check_branch
      %45 = sbr.rel (0) target = $region17
    $region16: #{tpu_custom_call.1} parent=1 // pred_region
      %46 = dma.done [#allocation4], 128
    $region17: #{tpu_custom_call.1} parent=1 // pred_fallthru
      _
    %47 = vsyncpa [#allocation3], 1
    %48 = vsyncpa [#allocation4], 1

</llo_original>
